<compile_context>
chip_gen: v5e
topology: v5e:2x2
jax: 0.10.0
libtpu: 0.0.40
codegen_flags: <defaults>
</compile_context>

<pallas_src>
import jax
import jax.numpy as jnp
from jax import lax
from jax.experimental import pallas as pl
from jax.experimental.pallas import tpu as pltpu


def _round_up(n, m):
    return ((n + m - 1) // m) * m


def rnn_kernel(x_ref, wih_t_ref, whh_t_ref, b_ref, wfc_t_ref, bfc_ref,
               out_ref, h_ref, p_ref):
    """One grid step = one chunk of C time steps.

    x_ref     : (C*Bp, I)   bf16, time-major chunk: row t_local*Bp + b
    wih_t_ref : (I, Hp)     bf16, W_ih^T            (constant across grid)
    whh_t_ref : (Hp, Hp)    bf16, W_hh^T            (constant across grid)
    b_ref     : (1, Hp)     f32,  b_ih + b_hh       (constant across grid)
    wfc_t_ref : (Hp, Op)    bf16, W_fc^T            (constant across grid)
    bfc_ref   : (1, Op)     f32                     (constant across grid)
    out_ref   : (Bp, Op)    f32, written only on the last chunk
    h_ref     : (Bp, Hp)    f32 VMEM scratch, hidden-state carry across chunks
    p_ref     : (C*Bp, Hp)  f32 VMEM scratch, per-chunk input projection
    """
    c = pl.program_id(0)
    Bp, Hp = h_ref.shape
    C = p_ref.shape[0] // Bp

    @pl.when(c == 0)
    def _():
        h_ref[...] = jnp.zeros_like(h_ref)

    # Chunk prologue: input projection hoisted out of the recurrence.
    # One lane-dense bf16 MXU GEMM (K = true input size, unpadded).
    p_ref[...] = (
        jnp.dot(x_ref[...], wih_t_ref[...], preferred_element_type=jnp.float32)
        + b_ref[...]
    )

    w_hh_t = whh_t_ref[...]  # bf16, loaded once, resident across the loop

    def step(t, h):
        # h_t = tanh(P[t] + h_{t-1} @ W_hh^T); P[t] already has x_t W_ih^T + biases.
        row = pl.multiple_of(t * Bp, Bp)
        hh = jnp.dot(h.astype(jnp.bfloat16), w_hh_t,
                     preferred_element_type=jnp.float32)
        return jnp.tanh(p_ref[pl.ds(row, Bp), :] + hh)

    h = lax.fori_loop(0, C, step, h_ref[...], unroll=min(C, 8))
    h_ref[...] = h

    @pl.when(c == pl.num_programs(0) - 1)
    def _():
        out_ref[...] = (
            jnp.dot(h.astype(jnp.bfloat16), wfc_t_ref[...],
                    preferred_element_type=jnp.float32)
            + bfc_ref[...]
        ).astype(out_ref.dtype)


def rnn_net_forward(x, w_ih, w_hh, b_ih, b_hh, w_fc, b_fc):
    """x: (B, T, input_size) batch-first, same as the PyTorch module."""
    B, T, I = x.shape
    H = w_ih.shape[0]
    O = w_fc.shape[0]

    # Batch -> sublane multiple (8); hidden/output -> lane multiples (128).
    # Zero padding is exact: padded weight rows/cols and bias entries are zero
    # and tanh(0) == 0, so padded hidden columns stay identically zero; padded
    # batch rows never mix with real rows and are sliced off at the end.
    Bp = _round_up(B, 8)
    Hp = _round_up(H, 128)
    Op = _round_up(O, 128)

    # Time-chunk size: largest "nice" divisor of T (no time padding — padded
    # steps would NOT be semantically neutral because of the biases).
    C = T
    for cand in (64, 32, 16, 8):
        if T > cand and T % cand == 0:
            C = cand
            break
    nc = T // C

    f32, bf16 = jnp.float32, jnp.bfloat16

    # Time-major flattened input (row t*Bp + b holds x[b, t, :]); input feature
    # dim left UNPADDED.  MXU operands in bf16, accumulation stays f32.
    x_tm = jnp.transpose(x.astype(f32), (1, 0, 2))                  # (T, B, I)
    x_p = jnp.zeros((T, Bp, I), f32).at[:, :B, :].set(x_tm)
    x_flat = x_p.reshape(T * Bp, I).astype(bf16)

    wih_t = jnp.zeros((I, Hp), f32).at[:, :H].set(w_ih.astype(f32).T).astype(bf16)
    whh_t = jnp.zeros((Hp, Hp), f32).at[:H, :H].set(w_hh.astype(f32).T).astype(bf16)
    wfc_t = jnp.zeros((Hp, Op), f32).at[:H, :O].set(w_fc.astype(f32).T).astype(bf16)
    b_rnn = jnp.zeros((1, Hp), f32).at[0, :H].set((b_ih + b_hh).astype(f32))
    b_fc2 = jnp.zeros((1, Op), f32).at[0, :O].set(b_fc.astype(f32))

    out_p = pl.pallas_call(
        rnn_kernel,
        out_shape=jax.ShapeDtypeStruct((Bp, Op), f32),
        grid_spec=pltpu.PrefetchScalarGridSpec(
            num_scalar_prefetch=0,
            grid=(nc,),
            in_specs=[
                pl.BlockSpec((C * Bp, I), lambda c: (c, 0)),   # streamed x chunk
                pl.BlockSpec((I, Hp), lambda c: (0, 0)),       # weights: fetched once,
                pl.BlockSpec((Hp, Hp), lambda c: (0, 0)),      # VMEM-resident across grid
                pl.BlockSpec((1, Hp), lambda c: (0, 0)),
                pl.BlockSpec((Hp, Op), lambda c: (0, 0)),
                pl.BlockSpec((1, Op), lambda c: (0, 0)),
            ],
            out_specs=pl.BlockSpec((Bp, Op), lambda c: (0, 0)),
            scratch_shapes=[
                pltpu.VMEM((Bp, Hp), f32),       # hidden-state carry
                pltpu.VMEM((C * Bp, Hp), f32),   # per-chunk input projection
            ],
        ),
        compiler_params=pltpu.CompilerParams(
            dimension_semantics=("arbitrary",),   # chunks carry h -> sequential
            vmem_limit_bytes=32 * 1024 * 1024,
        ),
    )(x_flat, wih_t, whh_t, b_rnn, wfc_t, b_fc2)

    return out_p[:B, :O].astype(x.dtype)


def reference_forward(x, w_ih, w_hh, b_ih, b_hh, w_fc, b_fc):
    """Pure-JAX f32 reference with identical semantics (sanity check)."""
    B, T, I = x.shape
    H = w_ih.shape[0]
    h = jnp.zeros((B, H), dtype=jnp.float32)
    for t in range(T):
        h = jnp.tanh(x[:, t, :] @ w_ih.T + b_ih + h @ w_hh.T + b_hh)
    return h @ w_fc.T + b_fc


if __name__ == "__main__":
    # Small shapes consistent with the module's forward.
    B, T = 2, 8
    input_size, hidden_size, output_size = 4, 32, 8

    key = jax.random.PRNGKey(0)
    k = jax.random.split(key, 8)
    scale = 1.0 / jnp.sqrt(hidden_size)

    x    = jax.random.normal(k[0], (B, T, input_size), dtype=jnp.float32)
    w_ih = jax.random.uniform(k[1], (hidden_size, input_size), minval=-scale, maxval=scale)
    w_hh = jax.random.uniform(k[2], (hidden_size, hidden_size), minval=-scale, maxval=scale)
    b_ih = jax.random.uniform(k[3], (hidden_size,), minval=-scale, maxval=scale)
    b_hh = jax.random.uniform(k[4], (hidden_size,), minval=-scale, maxval=scale)
    w_fc = jax.random.uniform(k[5], (output_size, hidden_size), minval=-scale, maxval=scale)
    b_fc = jax.random.uniform(k[6], (output_size,), minval=-scale, maxval=scale)

    out = rnn_net_forward(x, w_ih, w_hh, b_ih, b_hh, w_fc, b_fc)
    out = jax.block_until_ready(out)

    ref = reference_forward(x, w_ih, w_hh, b_ih, b_hh, w_fc, b_fc)
    assert out.shape == (B, output_size), out.shape
    # Tolerance loosened vs. the pure-f32 reference because MXU operands are bf16
    # (accumulation and all elementwise math remain f32).
    assert jnp.allclose(out, ref, atol=5e-2, rtol=5e-2), (out, ref)

    print("KERNEL_OK")
</pallas_src>

<mosaic_0001>
module attributes {stable_mosaic.version = 11 : i64} {
  func.func @rnn_kernel(%arg0: i32, %arg1: memref<64x4xbf16, #tpu.memory_space<vmem>>, %arg2: memref<4x128xbf16, #tpu.memory_space<vmem>>, %arg3: memref<128x128xbf16, #tpu.memory_space<vmem>>, %arg4: memref<1x128xf32, #tpu.memory_space<vmem>>, %arg5: memref<128x128xbf16, #tpu.memory_space<vmem>>, %arg6: memref<1x128xf32, #tpu.memory_space<vmem>>, %arg7: memref<8x128xf32, #tpu.memory_space<vmem>>, %arg8: memref<8x128xf32, #tpu.memory_space<vmem>>, %arg9: memref<64x128xf32, #tpu.memory_space<vmem>>) attributes {dimension_semantics = [#tpu.dimension_semantics<arbitrary>], iteration_bounds = array<i64: 1>, scalar_prefetch = 0 : i64, scratch_operands = 2 : i64, tpu.core_type = #tpu.core_type<tc>, window_params = [{transform_indices = @transform_0, window_bounds = array<i64: 64, 4>}, {pipeline_mode = #tpu.pipeline_mode<synchronous>, transform_indices = @transform_1, window_bounds = array<i64: 4, 128>}, {pipeline_mode = #tpu.pipeline_mode<synchronous>, transform_indices = @transform_2, window_bounds = array<i64: 128, 128>}, {pipeline_mode = #tpu.pipeline_mode<synchronous>, transform_indices = @transform_3, window_bounds = array<i64: 1, 128>}, {pipeline_mode = #tpu.pipeline_mode<synchronous>, transform_indices = @transform_4, window_bounds = array<i64: 128, 128>}, {pipeline_mode = #tpu.pipeline_mode<synchronous>, transform_indices = @transform_5, window_bounds = array<i64: 1, 128>}, {pipeline_mode = #tpu.pipeline_mode<synchronous>, transform_indices = @transform_6, window_bounds = array<i64: 8, 128>}]} {
    %c0_i32 = arith.constant 0 : i32
    %0 = arith.cmpi eq, %arg0, %c0_i32 : i32
    %1 = arith.extui %0 : i1 to i32
    %c0_i32_0 = arith.constant 0 : i32
    %2 = arith.cmpi ne, %1, %c0_i32_0 : i32
    scf.if %2 {
      %cst_41 = arith.constant 0.000000e+00 : f32
      %80 = vector.broadcast %cst_41 : f32 to vector<8x128xf32>
      %c0_42 = arith.constant 0 : index
      %c0_43 = arith.constant 0 : index
      %81 = vector.load %arg8[%c0_42, %c0_43] : memref<8x128xf32, #tpu.memory_space<vmem>>, vector<8x128xf32>
      tpu.vector_store %arg8[%c0_42, %c0_43], %80 {strides = array<i32>} : memref<8x128xf32, #tpu.memory_space<vmem>>, vector<8x128xf32>,
    } else {
    }
    %c0 = arith.constant 0 : index
    %c0_1 = arith.constant 0 : index
    %3 = vector.load %arg1[%c0, %c0_1] : memref<64x4xbf16, #tpu.memory_space<vmem>>, vector<64x4xbf16>
    %c0_2 = arith.constant 0 : index
    %c0_3 = arith.constant 0 : index
    %4 = vector.load %arg2[%c0_2, %c0_3] : memref<4x128xbf16, #tpu.memory_space<vmem>>, vector<4x128xbf16>
    %cst = arith.constant dense<0.000000e+00> : vector<64x128xf32>
    %5 = tpu.matmul %3, %4, %cst {dimension_numbers = #tpu.dot_dimension_numbers<[1], [0], [0], [1], [0, 0, 1, 1], [], []>} : vector<64x4xbf16>, vector<4x128xbf16>, vector<64x128xf32> -> vector<64x128xf32>
    %c0_4 = arith.constant 0 : index
    %c0_5 = arith.constant 0 : index
    %6 = vector.load %arg4[%c0_4, %c0_5] : memref<1x128xf32, #tpu.memory_space<vmem>>, vector<1x128xf32>
    %7 = vector.broadcast %6 : vector<1x128xf32> to vector<64x128xf32>
    %8 = arith.addf %5, %7 : vector<64x128xf32>
    %c0_6 = arith.constant 0 : index
    %c0_7 = arith.constant 0 : index
    %9 = vector.load %arg9[%c0_6, %c0_7] : memref<64x128xf32, #tpu.memory_space<vmem>>, vector<64x128xf32>
    tpu.vector_store %arg9[%c0_6, %c0_7], %8 {strides = array<i32>} : memref<64x128xf32, #tpu.memory_space<vmem>>, vector<64x128xf32>,
    %c0_8 = arith.constant 0 : index
    %c0_9 = arith.constant 0 : index
    %10 = vector.load %arg3[%c0_8, %c0_9] : memref<128x128xbf16, #tpu.memory_space<vmem>>, vector<128x128xbf16>
    %c0_10 = arith.constant 0 : index
    %c0_11 = arith.constant 0 : index
    %11 = vector.load %arg8[%c0_10, %c0_11] : memref<8x128xf32, #tpu.memory_space<vmem>>, vector<8x128xf32>
    %c0_i32_12 = arith.constant 0 : i32
    %c8_i32 = arith.constant 8 : i32
    %12 = arith.muli %c0_i32_12, %c8_i32 : i32
    %13 = tpu.assume_multiple %12, 8 : i32
    %14 = arith.truncf %11 : vector<8x128xf32> to vector<8x128xbf16>
    %cst_13 = arith.constant dense<0.000000e+00> : vector<8x128xf32>
    %15 = tpu.matmul %14, %10, %cst_13 {dimension_numbers = #tpu.dot_dimension_numbers<[1], [0], [0], [1], [0, 0, 1, 1], [], []>} : vector<8x128xbf16>, vector<128x128xbf16>, vector<8x128xf32> -> vector<8x128xf32>
    %16 = arith.index_cast %13 : i32 to index
    %c0_14 = arith.constant 0 : index
    %17 = vector.load %arg9[%16, %c0_14] : memref<64x128xf32, #tpu.memory_space<vmem>>, vector<8x128xf32>
    %18 = arith.addf %17, %15 : vector<8x128xf32>
    %19 = math.tanh %18 : vector<8x128xf32>
    %c1_i32 = arith.constant 1 : i32
    %c8_i32_15 = arith.constant 8 : i32
    %20 = arith.muli %c1_i32, %c8_i32_15 : i32
    %21 = tpu.assume_multiple %20, 8 : i32
    %22 = arith.truncf %19 : vector<8x128xf32> to vector<8x128xbf16>
    %cst_16 = arith.constant dense<0.000000e+00> : vector<8x128xf32>
    %23 = tpu.matmul %22, %10, %cst_16 {dimension_numbers = #tpu.dot_dimension_numbers<[1], [0], [0], [1], [0, 0, 1, 1], [], []>} : vector<8x128xbf16>, vector<128x128xbf16>, vector<8x128xf32> -> vector<8x128xf32>
    %24 = arith.index_cast %21 : i32 to index
    %c0_17 = arith.constant 0 : index
    %25 = vector.load %arg9[%24, %c0_17] : memref<64x128xf32, #tpu.memory_space<vmem>>, vector<8x128xf32>
    %26 = arith.addf %25, %23 : vector<8x128xf32>
    %27 = math.tanh %26 : vector<8x128xf32>
    %c2_i32 = arith.constant 2 : i32
    %c8_i32_18 = arith.constant 8 : i32
    %28 = arith.muli %c2_i32, %c8_i32_18 : i32
    %29 = tpu.assume_multiple %28, 8 : i32
    %30 = arith.truncf %27 : vector<8x128xf32> to vector<8x128xbf16>
    %cst_19 = arith.constant dense<0.000000e+00> : vector<8x128xf32>
    %31 = tpu.matmul %30, %10, %cst_19 {dimension_numbers = #tpu.dot_dimension_numbers<[1], [0], [0], [1], [0, 0, 1, 1], [], []>} : vector<8x128xbf16>, vector<128x128xbf16>, vector<8x128xf32> -> vector<8x128xf32>
    %32 = arith.index_cast %29 : i32 to index
    %c0_20 = arith.constant 0 : index
    %33 = vector.load %arg9[%32, %c0_20] : memref<64x128xf32, #tpu.memory_space<vmem>>, vector<8x128xf32>
    %34 = arith.addf %33, %31 : vector<8x128xf32>
    %35 = math.tanh %34 : vector<8x128xf32>
    %c3_i32 = arith.constant 3 : i32
    %c8_i32_21 = arith.constant 8 : i32
    %36 = arith.muli %c3_i32, %c8_i32_21 : i32
    %37 = tpu.assume_multiple %36, 8 : i32
    %38 = arith.truncf %35 : vector<8x128xf32> to vector<8x128xbf16>
    %cst_22 = arith.constant dense<0.000000e+00> : vector<8x128xf32>
    %39 = tpu.matmul %38, %10, %cst_22 {dimension_numbers = #tpu.dot_dimension_numbers<[1], [0], [0], [1], [0, 0, 1, 1], [], []>} : vector<8x128xbf16>, vector<128x128xbf16>, vector<8x128xf32> -> vector<8x128xf32>
    %40 = arith.index_cast %37 : i32 to index
    %c0_23 = arith.constant 0 : index
    %41 = vector.load %arg9[%40, %c0_23] : memref<64x128xf32, #tpu.memory_space<vmem>>, vector<8x128xf32>
    %42 = arith.addf %41, %39 : vector<8x128xf32>
    %43 = math.tanh %42 : vector<8x128xf32>
    %c4_i32 = arith.constant 4 : i32
    %c8_i32_24 = arith.constant 8 : i32
    %44 = arith.muli %c4_i32, %c8_i32_24 : i32
    %45 = tpu.assume_multiple %44, 8 : i32
    %46 = arith.truncf %43 : vector<8x128xf32> to vector<8x128xbf16>
    %cst_25 = arith.constant dense<0.000000e+00> : vector<8x128xf32>
    %47 = tpu.matmul %46, %10, %cst_25 {dimension_numbers = #tpu.dot_dimension_numbers<[1], [0], [0], [1], [0, 0, 1, 1], [], []>} : vector<8x128xbf16>, vector<128x128xbf16>, vector<8x128xf32> -> vector<8x128xf32>
    %48 = arith.index_cast %45 : i32 to index
    %c0_26 = arith.constant 0 : index
    %49 = vector.load %arg9[%48, %c0_26] : memref<64x128xf32, #tpu.memory_space<vmem>>, vector<8x128xf32>
    %50 = arith.addf %49, %47 : vector<8x128xf32>
    %51 = math.tanh %50 : vector<8x128xf32>
    %c5_i32 = arith.constant 5 : i32
    %c8_i32_27 = arith.constant 8 : i32
    %52 = arith.muli %c5_i32, %c8_i32_27 : i32
    %53 = tpu.assume_multiple %52, 8 : i32
    %54 = arith.truncf %51 : vector<8x128xf32> to vector<8x128xbf16>
    %cst_28 = arith.constant dense<0.000000e+00> : vector<8x128xf32>
    %55 = tpu.matmul %54, %10, %cst_28 {dimension_numbers = #tpu.dot_dimension_numbers<[1], [0], [0], [1], [0, 0, 1, 1], [], []>} : vector<8x128xbf16>, vector<128x128xbf16>, vector<8x128xf32> -> vector<8x128xf32>
    %56 = arith.index_cast %53 : i32 to index
    %c0_29 = arith.constant 0 : index
    %57 = vector.load %arg9[%56, %c0_29] : memref<64x128xf32, #tpu.memory_space<vmem>>, vector<8x128xf32>
    %58 = arith.addf %57, %55 : vector<8x128xf32>
    %59 = math.tanh %58 : vector<8x128xf32>
    %c6_i32 = arith.constant 6 : i32
    %c8_i32_30 = arith.constant 8 : i32
    %60 = arith.muli %c6_i32, %c8_i32_30 : i32
    %61 = tpu.assume_multiple %60, 8 : i32
    %62 = arith.truncf %59 : vector<8x128xf32> to vector<8x128xbf16>
    %cst_31 = arith.constant dense<0.000000e+00> : vector<8x128xf32>
    %63 = tpu.matmul %62, %10, %cst_31 {dimension_numbers = #tpu.dot_dimension_numbers<[1], [0], [0], [1], [0, 0, 1, 1], [], []>} : vector<8x128xbf16>, vector<128x128xbf16>, vector<8x128xf32> -> vector<8x128xf32>
    %64 = arith.index_cast %61 : i32 to index
    %c0_32 = arith.constant 0 : index
    %65 = vector.load %arg9[%64, %c0_32] : memref<64x128xf32, #tpu.memory_space<vmem>>, vector<8x128xf32>
    %66 = arith.addf %65, %63 : vector<8x128xf32>
    %67 = math.tanh %66 : vector<8x128xf32>
    %c7_i32 = arith.constant 7 : i32
    %c8_i32_33 = arith.constant 8 : i32
    %68 = arith.muli %c7_i32, %c8_i32_33 : i32
    %69 = tpu.assume_multiple %68, 8 : i32
    %70 = arith.truncf %67 : vector<8x128xf32> to vector<8x128xbf16>
    %cst_34 = arith.constant dense<0.000000e+00> : vector<8x128xf32>
    %71 = tpu.matmul %70, %10, %cst_34 {dimension_numbers = #tpu.dot_dimension_numbers<[1], [0], [0], [1], [0, 0, 1, 1], [], []>} : vector<8x128xbf16>, vector<128x128xbf16>, vector<8x128xf32> -> vector<8x128xf32>
    %72 = arith.index_cast %69 : i32 to index
    %c0_35 = arith.constant 0 : index
    %73 = vector.load %arg9[%72, %c0_35] : memref<64x128xf32, #tpu.memory_space<vmem>>, vector<8x128xf32>
    %74 = arith.addf %73, %71 : vector<8x128xf32>
    %75 = math.tanh %74 : vector<8x128xf32>
    %c8_i32_36 = arith.constant 8 : i32
    %c0_37 = arith.constant 0 : index
    %c0_38 = arith.constant 0 : index
    %76 = vector.load %arg8[%c0_37, %c0_38] : memref<8x128xf32, #tpu.memory_space<vmem>>, vector<8x128xf32>
    tpu.vector_store %arg8[%c0_37, %c0_38], %75 {strides = array<i32>} : memref<8x128xf32, #tpu.memory_space<vmem>>, vector<8x128xf32>,
    %c0_i32_39 = arith.constant 0 : i32
    %77 = arith.cmpi eq, %arg0, %c0_i32_39 : i32
    %78 = arith.extui %77 : i1 to i32
    %c0_i32_40 = arith.constant 0 : i32
    %79 = arith.cmpi ne, %78, %c0_i32_40 : i32
    scf.if %79 {
      %80 = arith.truncf %75 : vector<8x128xf32> to vector<8x128xbf16>
      %c0_41 = arith.constant 0 : index
      %c0_42 = arith.constant 0 : index
      %81 = vector.load %arg5[%c0_41, %c0_42] : memref<128x128xbf16, #tpu.memory_space<vmem>>, vector<128x128xbf16>
      %cst_43 = arith.constant dense<0.000000e+00> : vector<8x128xf32>
      %82 = tpu.matmul %80, %81, %cst_43 {dimension_numbers = #tpu.dot_dimension_numbers<[1], [0], [0], [1], [0, 0, 1, 1], [], []>} : vector<8x128xbf16>, vector<128x128xbf16>, vector<8x128xf32> -> vector<8x128xf32>
      %c0_44 = arith.constant 0 : index
      %c0_45 = arith.constant 0 : index
      %83 = vector.load %arg6[%c0_44, %c0_45] : memref<1x128xf32, #tpu.memory_space<vmem>>, vector<1x128xf32>
      %84 = vector.broadcast %83 : vector<1x128xf32> to vector<8x128xf32>
      %85 = arith.addf %82, %84 : vector<8x128xf32>
      %c0_46 = arith.constant 0 : index
      %c0_47 = arith.constant 0 : index
      %86 = vector.load %arg7[%c0_46, %c0_47] : memref<8x128xf32, #tpu.memory_space<vmem>>, vector<8x128xf32>
      tpu.vector_store %arg7[%c0_46, %c0_47], %85 {strides = array<i32>} : memref<8x128xf32, #tpu.memory_space<vmem>>, vector<8x128xf32>,
    } else {
    }
    return
  }
  func.func @transform_0(%arg0: i32) -> (i32, i32) {
    %c0_i32 = arith.constant 0 : i32
    %c0_i32_0 = arith.constant 0 : i32
    return %arg0, %c0_i32 : i32, i32
  }
  func.func @transform_1(%arg0: i32) -> (i32, i32) {
    %c0_i32 = arith.constant 0 : i32
    %c0_i32_0 = arith.constant 0 : i32
    %c0_i32_1 = arith.constant 0 : i32
    return %c0_i32, %c0_i32_0 : i32, i32
  }
  func.func @transform_2(%arg0: i32) -> (i32, i32) {
    %c0_i32 = arith.constant 0 : i32
    %c0_i32_0 = arith.constant 0 : i32
    %c0_i32_1 = arith.constant 0 : i32
    return %c0_i32, %c0_i32_0 : i32, i32
  }
  func.func @transform_3(%arg0: i32) -> (i32, i32) {
    %c0_i32 = arith.constant 0 : i32
    %c0_i32_0 = arith.constant 0 : i32
    %c0_i32_1 = arith.constant 0 : i32
    return %c0_i32, %c0_i32_0 : i32, i32
  }
  func.func @transform_4(%arg0: i32) -> (i32, i32) {
    %c0_i32 = arith.constant 0 : i32
    %c0_i32_0 = arith.constant 0 : i32
    %c0_i32_1 = arith.constant 0 : i32
    return %c0_i32, %c0_i32_0 : i32, i32
  }
  func.func @transform_5(%arg0: i32) -> (i32, i32) {
    %c0_i32 = arith.constant 0 : i32
    %c0_i32_0 = arith.constant 0 : i32
    %c0_i32_1 = arith.constant 0 : i32
    return %c0_i32, %c0_i32_0 : i32, i32
  }
  func.func @transform_6(%arg0: i32) -> (i32, i32) {
    %c0_i32 = arith.constant 0 : i32
    %c0_i32_0 = arith.constant 0 : i32
    %c0_i32_1 = arith.constant 0 : i32
    return %c0_i32, %c0_i32_0 : i32, i32
  }
}

</mosaic_0001>

<llo_original>
// kernel: tpu_custom_call.1
$region0: #{tpu_custom_call.1}
  #allocation0 [shape = 'u32[]', space=smem, size = 0x4, offset = 0x4, fixed_abs, tag = 'smem constant byte address 0x4 - core index']
  #allocation1 [shape = 'u32[72,128]{1,0:T(1,128)}', space=vmem, size = 0x9000, scoped, tag = 'internal scratch']
  #allocation2 [shape = 'f32[8,128]{1,0:T(8,128)}', space=vmem, size = 0x1000, scoped, tag = 'scratch operand']
  #allocation3 [shape = 'f32[64,128]{1,0:T(8,128)}', space=vmem, size = 0x8000, scoped, tag = 'scratch operand']
  %s0 = inlined_call_operand.vmem [shape: bf16[64,4], index: 0, kind: input, shape index: {}]
  %s1 = inlined_call_operand.vmem [shape: bf16[4,128], index: 1, kind: input, shape index: {}]
  %s2 = inlined_call_operand.hbm [shape: bf16[128,128], index: 2, kind: input, shape index: {}]
  %s3 = inlined_call_operand.vmem [shape: f32[1,128], index: 3, kind: input, shape index: {}]
  %s4 = inlined_call_operand.hbm [shape: bf16[128,128], index: 4, kind: input, shape index: {}]
  %s5 = inlined_call_operand.vmem [shape: f32[1,128], index: 5, kind: input, shape index: {}]
  %s6 = inlined_call_operand.hbm [shape: f32[8,128], index: 6, kind: output, shape index: {}]
  %s7 = sld [smem:[#allocation0]]
  $region50: #{tpu_custom_call.1} parent=0
    _
  %s9 = ssub.s32 1, %s7
  %s10 = scalar_select 0, %s9, %s7
  $region1: #{tpu_custom_call.1} parent=0
    #allocation4 [shape = 'u8[32768]{0}', space=vmem, size = 0x8000, scoped, tag = 'input window, operand 2, single buffered']
    #allocation5 [shape = 's32[1]{0}', space=sflag, size = 0x4, scoped, tag = 'scoped memory for tpu_custom_call.1']
    #allocation6 [shape = 's32[1]{0}', space=sflag, size = 0x4, scoped, tag = 'scoped memory for tpu_custom_call.1']
    #allocation7 [shape = 'u8[32768]{0}', space=vmem, size = 0x8000, scoped, tag = 'input window, operand 4, single buffered']
    #allocation8 [shape = 's32[1]{0}', space=sflag, size = 0x4, scoped, tag = 'scoped memory for tpu_custom_call.1']
    #allocation9 [shape = 'u8[4096]{0}', space=vmem, size = 0x1000, scoped, tag = 'output window, operand 0, single buffered']
    %11 = vsyncpa [#allocation5], 0
    %12 = vsyncpa [#allocation8], 0
    %13 = vsyncpa [#allocation6], 0
    // Predicated region
    $region2: #{tpu_custom_call.1} parent=1 // pred_check
      _
    $region3: #{tpu_custom_call.1} parent=1 // pred_check_branch
      %15 = sbr.rel (0) target = $region5
    $region4: #{tpu_custom_call.1} parent=1 // pred_region
      _
    $region5: #{tpu_custom_call.1} parent=1 // pred_fallthru
      _
    // Predicated region
    $region6: #{tpu_custom_call.1} parent=1 // pred_check
      _
    $region7: #{tpu_custom_call.1} parent=1 // pred_check_branch
      %17 = sbr.rel (0) target = $region9
    $region8: #{tpu_custom_call.1} parent=1 // pred_region
      _
    $region9: #{tpu_custom_call.1} parent=1 // pred_fallthru
      _
    // Predicated region
    $region10: #{tpu_custom_call.1} parent=1 // pred_check
      _
    $region11: #{tpu_custom_call.1} parent=1 // pred_check_branch
      %19 = sbr.rel (0) target = $region13
    $region12: #{tpu_custom_call.1} parent=1 // pred_region
      %21 = vsyncadd [#allocation5], 0
      %s22 = sshll.u32 %s2, 4
      %s23 = int_to_ptr.hbm [resolvable:$true] %s22
      %s24 = sshll.u32 [#allocation4], 4
      %s25 = int_to_ptr.vmem [resolvable:$true] %s24
      %30 = dma.hbm_to_vmem [thread:$0]  %s23, 1024, %s25, [#allocation5], 64, 64, 4
    $region13: #{tpu_custom_call.1} parent=1 // pred_fallthru
      _
    // Predicated region
    $region14: #{tpu_custom_call.1} parent=1 // pred_check
      _
    $region15: #{tpu_custom_call.1} parent=1 // pred_check_branch
      %32 = sbr.rel (0) target = $region17
    $region16: #{tpu_custom_call.1} parent=1 // pred_region
      _
    $region17: #{tpu_custom_call.1} parent=1 // pred_fallthru
      _
    // Predicated region
    $region18: #{tpu_custom_call.1} parent=1 // pred_check
      _
    $region19: #{tpu_custom_call.1} parent=1 // pred_check_branch
      %34 = sbr.rel (0) target = $region21
    $region20: #{tpu_custom_call.1} parent=1 // pred_region
      %36 = vsyncadd [#allocation8], 0
      %s37 = sshll.u32 %s4, 4
      %s38 = int_to_ptr.hbm [resolvable:$true] %s37
      %s39 = sshll.u32 [#allocation7], 4
      %s40 = int_to_ptr.vmem [resolvable:$true] %s39
      %45 = dma.hbm_to_vmem [thread:$0]  %s38, 1024, %s40, [#allocation8], 64, 64, 4
    $region21: #{tpu_custom_call.1} parent=1 // pred_fallthru
      _
    // Predicated region
    $region22: #{tpu_custom_call.1} parent=1 // pred_check
      _
    $region23: #{tpu_custom_call.1} parent=1 // pred_check_branch
      %47 = sbr.rel (0) target = $region25
    $region24: #{tpu_custom_call.1} parent=1 // pred_region
      _
    $region25: #{tpu_custom_call.1} parent=1 // pred_fallthru
      _
    // Predicated region
    $region26: #{tpu_custom_call.1} parent=1 // pred_check
      _
    $region27: #{tpu_custom_call.1} parent=1 // pred_check_branch
      %49 = sbr.rel (0) target = $region29
    $region28: #{tpu_custom_call.1} parent=1 // pred_region
      %51 = dma.done [#allocation5], 1024
    $region29: #{tpu_custom_call.1} parent=1 // pred_fallthru
      _
    // Predicated region
    $region30: #{tpu_custom_call.1} parent=1 // pred_check
      _
    $region31: #{tpu_custom_call.1} parent=1 // pred_check_branch
      %53 = sbr.rel (0) target = $region33
    $region32: #{tpu_custom_call.1} parent=1 // pred_region
      %55 = dma.done [#allocation8], 1024
    $region33: #{tpu_custom_call.1} parent=1 // pred_fallthru
      _
    %p57 = scmp.eq.s32.totalorder 0, 0
    // Predicated region
    $region34: #{tpu_custom_call.1} parent=1 // pred_check
      %p58 = pneg %p57
    $region35: #{tpu_custom_call.1} parent=1 // pred_check_branch
      %60 = sbr.rel (%p58) target = $region37
    $region36: #{tpu_custom_call.1} parent=1 // pred_region
      %61 = vst [vmem:[#allocation2] sm:$0xff] 0.0
    $region37: #{tpu_custom_call.1} parent=1 // pred_fallthru
      _
    %v62 = vld [vmem:[%s0] sm:$0xf]
    %v63 = vld [vmem:[%s0 + $0x4] sm:$0xf]
    %v64 = vld [vmem:[%s0 + $0x8] sm:$0xf]
    %v65 = vld [vmem:[%s0 + $0xc] sm:$0xf]
    %v66 = vld [vmem:[%s0 + $0x10] sm:$0xf]
    %v67 = vld [vmem:[%s0 + $0x14] sm:$0xf]
    %v68 = vld [vmem:[%s0 + $0x18] sm:$0xf]
    %v69 = vld [vmem:[%s0 + $0x1c] sm:$0xf]
    %v70 = vld [vmem:[%s1] sm:$0x3]
    %v71 = vld [vmem:[%s3] sm:$0x1]
    %v73 = vperm.slane %v71, 0
    %v83 = vunpack.c.l.b16 %v62
    %v84 = vunpack.c.l.b16 %v63
    %v85 = vunpack.c.l.b16 %v64
    %v86 = vunpack.c.l.b16 %v65
    %v87 = vunpack.c.l.b16 %v66
    %v88 = vunpack.c.l.b16 %v67
    %v89 = vunpack.c.l.b16 %v68
    %v90 = vunpack.c.l.b16 %v69
    %v91 = vpack.c.b16 %v84, %v83
    %v92 = vpack.c.b16 %v86, %v85
    %v93 = vpack.c.b16 %v88, %v87
    %v94 = vpack.c.b16 %v90, %v89
    %vm95 = vcmask 31744
    %v97 = vsel %vm95, %v91, 0
    %v100 = vsel %vm95, %v92, 0
    %v103 = vsel %vm95, %v93, 0
    %v106 = vsel %vm95, %v94, 0
    %vm108 = vcmask 1041408
    %v110 = vsel %vm108, %v70, 0
    %112 = vmatpush.bf16.msra.mxu0 0
    %113 = vmatpush.bf16.msra.mxu0 0
    %114 = vmatpush.bf16.msra.mxu0 0
    %115 = vmatpush.bf16.msra.mxu0 0
    %116 = vmatpush.bf16.msra.mxu0 0
    %117 = vmatpush.bf16.msra.mxu0 0
    %118 = vmatpush.bf16.msra.mxu0 0
    %119 = vmatpush.bf16.msra.mxu0 %v110
    %120 = vmatmul.bf16.gmra.mxu0 %v97
    %v121 = vpop.f32.mrf.mxu0
    %v122 = vadd.f32 %v73, %v121
    %v123 = vpop.f32.mrf.mxu0
    %v124 = vadd.f32 %v73, %v123
    %125 = vmatmul.bf16.gmra.mxu0 %v100
    %v126 = vpop.f32.mrf.mxu0
    %v127 = vadd.f32 %v73, %v126
    %v128 = vpop.f32.mrf.mxu0
    %v129 = vadd.f32 %v73, %v128
    %130 = vmatmul.bf16.gmra.mxu0 %v103
    %v131 = vpop.f32.mrf.mxu0
    %v132 = vadd.f32 %v73, %v131
    %v133 = vpop.f32.mrf.mxu0
    %v134 = vadd.f32 %v73, %v133
    %135 = vmatmul.bf16.gmra.mxu0 %v106
    %v136 = vpop.f32.mrf.mxu0
    %v137 = vadd.f32 %v73, %v136
    %v138 = vpop.f32.mrf.mxu0
    %v139 = vadd.f32 %v73, %v138
    %140 = vdwg.mxu0
    %141 = vst [vmem:[#allocation3] sm:$0xff] %v122
    %142 = vst [vmem:[#allocation3 + $0x8] sm:$0xff] %v124
    %143 = vst [vmem:[#allocation3 + $0x10] sm:$0xff] %v127
    %144 = vst [vmem:[#allocation3 + $0x18] sm:$0xff] %v129
    %145 = vst [vmem:[#allocation3 + $0x20] sm:$0xff] %v132
    %146 = vst [vmem:[#allocation3 + $0x28] sm:$0xff] %v134
    %147 = vst [vmem:[#allocation3 + $0x30] sm:$0xff] %v137
    %148 = vst [vmem:[#allocation3 + $0x38] sm:$0xff] %v139
    %v149 = vld [vmem:[#allocation4] sm:$0xf]
    %v150 = vld [vmem:[#allocation4 + $0x4] sm:$0xf]
    %v151 = vld [vmem:[#allocation4 + $0x8] sm:$0xf]
    %v152 = vld [vmem:[#allocation4 + $0xc] sm:$0xf]
    %v153 = vld [vmem:[#allocation4 + $0x10] sm:$0xf]
    %v154 = vld [vmem:[#allocation4 + $0x14] sm:$0xf]
    %v155 = vld [vmem:[#allocation4 + $0x18] sm:$0xf]
    %v156 = vld [vmem:[#allocation4 + $0x1c] sm:$0xf]
    %v157 = vld [vmem:[#allocation4 + $0x20] sm:$0xf]
    %v158 = vld [vmem:[#allocation4 + $0x24] sm:$0xf]
    %v159 = vld [vmem:[#allocation4 + $0x28] sm:$0xf]
    %v160 = vld [vmem:[#allocation4 + $0x2c] sm:$0xf]
    %v161 = vld [vmem:[#allocation4 + $0x30] sm:$0xf]
    %v162 = vld [vmem:[#allocation4 + $0x34] sm:$0xf]
    %v163 = vld [vmem:[#allocation4 + $0x38] sm:$0xf]
    %v164 = vld [vmem:[#allocation4 + $0x3c] sm:$0xf]
    %v165 = vld [vmem:[#allocation2] sm:$0xff]
    %v166 = vpack.c.bf16 %v165, %v165
    %v183 = vunpack.c.l.b16 %v149
    %v184 = vunpack.c.l.b16 %v150
    %v185 = vunpack.c.l.b16 %v151
    %v186 = vunpack.c.l.b16 %v152
    %v187 = vunpack.c.l.b16 %v153
    %v188 = vunpack.c.l.b16 %v154
    %v189 = vunpack.c.l.b16 %v155
    %v190 = vunpack.c.l.b16 %v156
    %v191 = vunpack.c.l.b16 %v157
    %v192 = vunpack.c.l.b16 %v158
    %v193 = vunpack.c.l.b16 %v159
    %v194 = vunpack.c.l.b16 %v160
    %v195 = vunpack.c.l.b16 %v161
    %v196 = vunpack.c.l.b16 %v162
    %v197 = vunpack.c.l.b16 %v163
    %v198 = vunpack.c.l.b16 %v164
    %v199 = vpack.c.b16 %v184, %v183
    %v200 = vpack.c.b16 %v186, %v185
    %v201 = vpack.c.b16 %v188, %v187
    %v202 = vpack.c.b16 %v190, %v189
    %v203 = vpack.c.b16 %v192, %v191
    %v204 = vpack.c.b16 %v194, %v193
    %v205 = vpack.c.b16 %v196, %v195
    %v206 = vpack.c.b16 %v198, %v197
    %215 = vmatpush.bf16.msra.mxu0 %v206
    %216 = vmatpush.bf16.msra.mxu0 %v205
    %217 = vmatpush.bf16.msra.mxu0 %v204
    %218 = vmatpush.bf16.msra.mxu0 %v203
    %219 = vmatpush.bf16.msra.mxu0 %v202
    %220 = vmatpush.bf16.msra.mxu0 %v201
    %221 = vmatpush.bf16.msra.mxu0 %v200
    %222 = vmatpush.bf16.msra.mxu0 %v199
    %223 = vmatmul.bf16.gmra.mxu0 %v166
    %v224 = vpop.f32.mrf.mxu0
    %v225 = vadd.f32 0.0, %v224
    %v226 = vpop.f32.mrf.mxu0
    %227 = vdwg.mxu0
    %v228 = vld [vmem:[#allocation3] sm:$0xff]
    %v229 = vadd.f32 %v228, %v225
    %v230 = vtanh.pop %v229
    %v231 = vpack.c.bf16 %v230, %v230
    %232 = vmatpush.bf16.msra.mxu0 %v206
    %233 = vmatpush.bf16.msra.mxu0 %v205
    %234 = vmatpush.bf16.msra.mxu0 %v204
    %235 = vmatpush.bf16.msra.mxu0 %v203
    %236 = vmatpush.bf16.msra.mxu0 %v202
    %237 = vmatpush.bf16.msra.mxu0 %v201
    %238 = vmatpush.bf16.msra.mxu0 %v200
    %239 = vmatpush.bf16.msra.mxu0 %v199
    %240 = vmatmul.bf16.gmra.mxu0 %v231
    %v241 = vpop.f32.mrf.mxu0
    %v242 = vadd.f32 0.0, %v241
    %v243 = vpop.f32.mrf.mxu0
    %244 = vdwg.mxu0
    %s245 = scalar_lea.vmem [#allocation3], 8
    %v246 = vld [vmem:[%s245] sm:$0xff]
    %v247 = vadd.f32 %v246, %v242
    %v248 = vtanh.pop %v247
    %v249 = vpack.c.bf16 %v248, %v248
    %250 = vmatpush.bf16.msra.mxu0 %v206
    %251 = vmatpush.bf16.msra.mxu0 %v205
    %252 = vmatpush.bf16.msra.mxu0 %v204
    %253 = vmatpush.bf16.msra.mxu0 %v203
    %254 = vmatpush.bf16.msra.mxu0 %v202
    %255 = vmatpush.bf16.msra.mxu0 %v201
    %256 = vmatpush.bf16.msra.mxu0 %v200
    %257 = vmatpush.bf16.msra.mxu0 %v199
    %258 = vmatmul.bf16.gmra.mxu0 %v249
    %v259 = vpop.f32.mrf.mxu0
    %v260 = vadd.f32 0.0, %v259
    %v261 = vpop.f32.mrf.mxu0
    %262 = vdwg.mxu0
    %s263 = scalar_lea.vmem [#allocation3], 16
    %v264 = vld [vmem:[%s263] sm:$0xff]
    %v265 = vadd.f32 %v264, %v260
    %v266 = vtanh.pop %v265
    %v267 = vpack.c.bf16 %v266, %v266
    %268 = vmatpush.bf16.msra.mxu0 %v206
    %269 = vmatpush.bf16.msra.mxu0 %v205
    %270 = vmatpush.bf16.msra.mxu0 %v204
    %271 = vmatpush.bf16.msra.mxu0 %v203
    %272 = vmatpush.bf16.msra.mxu0 %v202
    %273 = vmatpush.bf16.msra.mxu0 %v201
    %274 = vmatpush.bf16.msra.mxu0 %v200
    %275 = vmatpush.bf16.msra.mxu0 %v199
    %276 = vmatmul.bf16.gmra.mxu0 %v267
    %v277 = vpop.f32.mrf.mxu0
    %v278 = vadd.f32 0.0, %v277
    %v279 = vpop.f32.mrf.mxu0
    %280 = vdwg.mxu0
    %s281 = scalar_lea.vmem [#allocation3], 24
    %v282 = vld [vmem:[%s281] sm:$0xff]
    %v283 = vadd.f32 %v282, %v278
    %v284 = vtanh.pop %v283
    %v285 = vpack.c.bf16 %v284, %v284
    %286 = vmatpush.bf16.msra.mxu0 %v206
    %287 = vmatpush.bf16.msra.mxu0 %v205
    %288 = vmatpush.bf16.msra.mxu0 %v204
    %289 = vmatpush.bf16.msra.mxu0 %v203
    %290 = vmatpush.bf16.msra.mxu0 %v202
    %291 = vmatpush.bf16.msra.mxu0 %v201
    %292 = vmatpush.bf16.msra.mxu0 %v200
    %293 = vmatpush.bf16.msra.mxu0 %v199
    %294 = vmatmul.bf16.gmra.mxu0 %v285
    %v295 = vpop.f32.mrf.mxu0
    %v296 = vadd.f32 0.0, %v295
    %v297 = vpop.f32.mrf.mxu0
    %298 = vdwg.mxu0
    %s299 = scalar_lea.vmem [#allocation3], 32
    %v300 = vld [vmem:[%s299] sm:$0xff]
    %v301 = vadd.f32 %v300, %v296
    %v302 = vtanh.pop %v301
    %v303 = vpack.c.bf16 %v302, %v302
    %304 = vmatpush.bf16.msra.mxu0 %v206
    %305 = vmatpush.bf16.msra.mxu0 %v205
    %306 = vmatpush.bf16.msra.mxu0 %v204
    %307 = vmatpush.bf16.msra.mxu0 %v203
    %308 = vmatpush.bf16.msra.mxu0 %v202
    %309 = vmatpush.bf16.msra.mxu0 %v201
    %310 = vmatpush.bf16.msra.mxu0 %v200
    %311 = vmatpush.bf16.msra.mxu0 %v199
    %312 = vmatmul.bf16.gmra.mxu0 %v303
    %v313 = vpop.f32.mrf.mxu0
    %v314 = vadd.f32 0.0, %v313
    %v315 = vpop.f32.mrf.mxu0
    %316 = vdwg.mxu0
    %s317 = scalar_lea.vmem [#allocation3], 40
    %v318 = vld [vmem:[%s317] sm:$0xff]
    %v319 = vadd.f32 %v318, %v314
    %v320 = vtanh.pop %v319
    %v321 = vpack.c.bf16 %v320, %v320
    %322 = vmatpush.bf16.msra.mxu0 %v206
    %323 = vmatpush.bf16.msra.mxu0 %v205
    %324 = vmatpush.bf16.msra.mxu0 %v204
    %325 = vmatpush.bf16.msra.mxu0 %v203
    %326 = vmatpush.bf16.msra.mxu0 %v202
    %327 = vmatpush.bf16.msra.mxu0 %v201
    %328 = vmatpush.bf16.msra.mxu0 %v200
    %329 = vmatpush.bf16.msra.mxu0 %v199
    %330 = vmatmul.bf16.gmra.mxu0 %v321
    %v331 = vpop.f32.mrf.mxu0
    %v332 = vadd.f32 0.0, %v331
    %v333 = vpop.f32.mrf.mxu0
    %334 = vdwg.mxu0
    %s335 = scalar_lea.vmem [#allocation3], 48
    %v336 = vld [vmem:[%s335] sm:$0xff]
    %v337 = vadd.f32 %v336, %v332
    %v338 = vtanh.pop %v337
    %v339 = vpack.c.bf16 %v338, %v338
    %340 = vmatpush.bf16.msra.mxu0 %v206
    %341 = vmatpush.bf16.msra.mxu0 %v205
    %342 = vmatpush.bf16.msra.mxu0 %v204
    %343 = vmatpush.bf16.msra.mxu0 %v203
    %344 = vmatpush.bf16.msra.mxu0 %v202
    %345 = vmatpush.bf16.msra.mxu0 %v201
    %346 = vmatpush.bf16.msra.mxu0 %v200
    %347 = vmatpush.bf16.msra.mxu0 %v199
    %348 = vmatmul.bf16.gmra.mxu0 %v339
    %v349 = vpop.f32.mrf.mxu0
    %v350 = vadd.f32 0.0, %v349
    %v351 = vpop.f32.mrf.mxu0
    %352 = vdwg.mxu0
    %s353 = scalar_lea.vmem [#allocation3], 56
    %v354 = vld [vmem:[%s353] sm:$0xff]
    %v355 = vadd.f32 %v354, %v350
    %v356 = vtanh.pop %v355
    %357 = vst [vmem:[#allocation2] sm:$0xff] %v356
    // Predicated region
    $region38: #{tpu_custom_call.1} parent=1 // pred_check
      %p358 = pneg %p57
    $region39: #{tpu_custom_call.1} parent=1 // pred_check_branch
      %360 = sbr.rel (%p358) target = $region41
    $region40: #{tpu_custom_call.1} parent=1 // pred_region
      %v361 = vpack.c.bf16 %v356, %v356
      %v362 = vld [vmem:[#allocation7] sm:$0xf]
      %v363 = vld [vmem:[#allocation7 + $0x4] sm:$0xf]
      %v364 = vld [vmem:[#allocation7 + $0x8] sm:$0xf]
      %v365 = vld [vmem:[#allocation7 + $0xc] sm:$0xf]
      %v366 = vld [vmem:[#allocation7 + $0x10] sm:$0xf]
      %v367 = vld [vmem:[#allocation7 + $0x14] sm:$0xf]
      %v368 = vld [vmem:[#allocation7 + $0x18] sm:$0xf]
      %v369 = vld [vmem:[#allocation7 + $0x1c] sm:$0xf]
      %v370 = vld [vmem:[#allocation7 + $0x20] sm:$0xf]
      %v371 = vld [vmem:[#allocation7 + $0x24] sm:$0xf]
      %v372 = vld [vmem:[#allocation7 + $0x28] sm:$0xf]
      %v373 = vld [vmem:[#allocation7 + $0x2c] sm:$0xf]
      %v374 = vld [vmem:[#allocation7 + $0x30] sm:$0xf]
      %v375 = vld [vmem:[#allocation7 + $0x34] sm:$0xf]
      %v376 = vld [vmem:[#allocation7 + $0x38] sm:$0xf]
      %v377 = vld [vmem:[#allocation7 + $0x3c] sm:$0xf]
      %v378 = vld [vmem:[%s5] sm:$0x1]
      %v380 = vperm.slane %v378, 0
      %v398 = vunpack.c.l.b16 %v362
      %v399 = vunpack.c.l.b16 %v363
      %v400 = vunpack.c.l.b16 %v364
      %v401 = vunpack.c.l.b16 %v365
      %v402 = vunpack.c.l.b16 %v366
      %v403 = vunpack.c.l.b16 %v367
      %v404 = vunpack.c.l.b16 %v368
      %v405 = vunpack.c.l.b16 %v369
      %v406 = vunpack.c.l.b16 %v370
      %v407 = vunpack.c.l.b16 %v371
      %v408 = vunpack.c.l.b16 %v372
      %v409 = vunpack.c.l.b16 %v373
      %v410 = vunpack.c.l.b16 %v374
      %v411 = vunpack.c.l.b16 %v375
      %v412 = vunpack.c.l.b16 %v376
      %v413 = vunpack.c.l.b16 %v377
      %v414 = vpack.c.b16 %v399, %v398
      %v415 = vpack.c.b16 %v401, %v400
      %v416 = vpack.c.b16 %v403, %v402
      %v417 = vpack.c.b16 %v405, %v404
      %v418 = vpack.c.b16 %v407, %v406
      %v419 = vpack.c.b16 %v409, %v408
      %v420 = vpack.c.b16 %v411, %v410
      %v421 = vpack.c.b16 %v413, %v412
      %430 = vmatpush.bf16.msra.mxu0 %v421
      %431 = vmatpush.bf16.msra.mxu0 %v420
      %432 = vmatpush.bf16.msra.mxu0 %v419
      %433 = vmatpush.bf16.msra.mxu0 %v418
      %434 = vmatpush.bf16.msra.mxu0 %v417
      %435 = vmatpush.bf16.msra.mxu0 %v416
      %436 = vmatpush.bf16.msra.mxu0 %v415
      %437 = vmatpush.bf16.msra.mxu0 %v414
      %438 = vmatmul.bf16.gmra.mxu0 %v361
      %v439 = vpop.f32.mrf.mxu0
      %v440 = vadd.f32 %v380, %v439
      %v441 = vpop.f32.mrf.mxu0
      %442 = vdwg.mxu0
      %443 = vst [vmem:[#allocation9] sm:$0xff] %v440
    $region41: #{tpu_custom_call.1} parent=1 // pred_fallthru
      _
    // Predicated region
    $region42: #{tpu_custom_call.1} parent=1 // pred_check
      _
    $region43: #{tpu_custom_call.1} parent=1 // pred_check_branch
      %445 = sbr.rel (0) target = $region45
    $region44: #{tpu_custom_call.1} parent=1 // pred_region
      %447 = vsyncadd [#allocation6], 0
      %s449 = sshll.u32 [#allocation9], 4
      %s450 = int_to_ptr.vmem [resolvable:$true] %s449
      %s451 = sshll.u32 %s6, 4
      %s452 = int_to_ptr.hbm [resolvable:$true] %s451
      %454 = dma.vmem_to_hbm [thread:$0]  %s450, 128, %s452, [#allocation6]
    $region45: #{tpu_custom_call.1} parent=1 // pred_fallthru
      _
    // Predicated region
    $region46: #{tpu_custom_call.1} parent=1 // pred_check
      _
    $region47: #{tpu_custom_call.1} parent=1 // pred_check_branch
      %456 = sbr.rel (0) target = $region49
    $region48: #{tpu_custom_call.1} parent=1 // pred_region
      %458 = dma.done [#allocation6], 128
    $region49: #{tpu_custom_call.1} parent=1 // pred_fallthru
      _
    %459 = vsyncpa [#allocation5], 1
    %460 = vsyncpa [#allocation8], 1
    %461 = vsyncpa [#allocation6], 1

</llo_original>
